<compile_context>
chip_gen: v7x
topology: tpu7x:2x2x1
jax: 0.10.0
libtpu: 0.0.40
codegen_flags: <defaults>
</compile_context>

<pallas_src>
import jax
import jax.numpy as jnp
from jax.experimental import pallas as pl
from jax.experimental.pallas import tpu as pltpu


def _round_up(x, m):
    return (x + m - 1) // m * m


def _cdiv(a, b):
    return (a + b - 1) // b


def _ffn_kernel(x_ref, w1_ref, b1_ref, w2_ref, b2_ref, o_ref, acc_ref):
    # Grid: (row tiles "parallel", d_ff chunks "arbitrary").  K-accumulate the second
    # matmul over d_ff chunks into an f32 scratch; finalize on the last chunk.
    j = pl.program_id(1)

    @pl.when(j == 0)
    def _():
        acc_ref[...] = jnp.zeros_like(acc_ref)

    xb = x_ref[...].astype(w1_ref.dtype)                       # in-kernel bf16 cast
    h = jnp.dot(xb, w1_ref[...], preferred_element_type=jnp.float32)
    h = jnp.maximum(h + b1_ref[...], 0.0)                      # bias + relu in f32
    # dropout is identity in eval mode
    acc_ref[...] += jnp.dot(h.astype(w2_ref.dtype), w2_ref[...],
                            preferred_element_type=jnp.float32)

    @pl.when(j == pl.num_programs(1) - 1)
    def _():
        o_ref[...] = (acc_ref[...] + b2_ref[...]).astype(o_ref.dtype)


def _vmem_limit_bytes():
    # ~75% of physical VMEM (96 MiB on v5e/v6e, 48 MiB on v7x); safe fallback 48 MiB.
    try:
        cap = pltpu.get_tpu_info().vmem_capacity_bytes
    except Exception:
        cap = 64 * 1024 * 1024
    return int(min(cap * 3 // 4, 112 * 1024 * 1024))


def _pick_tiles(m, d_in_p, d_ff_p, d_out_p, x_bytes, out_bytes, w_bytes, vmem_budget):
    margin = 6 << 20                              # Mosaic scratch / DMA sems headroom
    avail_total = max(vmem_budget - margin, 8 << 20)

    # d_ff chunk: keep the (double-buffered) streamed W1/W2 chunk blocks <= ~half the
    # budget.  Single chunk (fully resident weights) for typical transformer shapes.
    def wfoot(tf):
        return 2 * w_bytes * (d_in_p + d_out_p) * tf + 2 * 4 * (tf + d_out_p)

    tile_f = d_ff_p
    while tile_f > 512 and wfoot(tile_f) > avail_total // 2:
        tile_f = max(512, _round_up(tile_f // 2, 128))

    avail = max(avail_total - wfoot(tile_f), 1 << 20)

    per_row = (2 * d_in_p * x_bytes               # x tile, double-buffered (input dtype)
               + 2 * d_out_p * out_bytes          # out tile, double-buffered
               + d_out_p * 4                      # f32 accumulator scratch
               + tile_f * 4                       # f32 hidden chunk
               + tile_f * w_bytes                 # bf16 hidden chunk (2nd matmul input)
               + d_in_p * w_bytes)                # bf16 cast of the x tile
    tile_m = int(avail // per_row)

    cap = 2048 if vmem_budget >= (80 << 20) else 1024   # bigger tiles on 128 MiB parts
    tile_m = max(8, min(tile_m, cap))

    # Megacore (v7x): keep >= 2 row tiles when the problem is big enough to split.
    if m >= 512:
        tile_m = min(tile_m, _round_up(_cdiv(m, 2), 128))

    # Alignment: 128-row tiles once large (clean (8,128) vreg tiling, even core split),
    # else 8-row (f32 sublane); never exceed the (padded) problem.
    if tile_m >= 256:
        tile_m = (tile_m // 128) * 128
    else:
        tile_m = max(8, (tile_m // 8) * 8)
    tile_m = min(tile_m, _round_up(m, 8))
    return tile_m, tile_f


def positionwise_feed_forward(x, w1, b1, w2, b2, compute_dtype=jnp.bfloat16):
    """y = relu(x @ w1 + b1) @ w2 + b2.

    x: [B, S, d_model]; w1: [d_model, d_ff]; b1: [1, d_ff]; w2: [d_ff, d_model];
    b2: [1, d_model].  Pass compute_dtype=jnp.float32 for bit-parity with the f32
    PyTorch module (default bf16 matmuls keep f32 accumulation).
    """
    B, S, d_model = x.shape
    d_ff = w1.shape[1]
    out_dtype = x.dtype
    M = B * S

    d_in_p = _round_up(d_model, 128)
    d_out_p = _round_up(d_model, 128)
    d_ff_p0 = _round_up(d_ff, 128)

    x_bytes = jnp.dtype(x.dtype).itemsize
    out_bytes = jnp.dtype(out_dtype).itemsize
    w_bytes = jnp.dtype(compute_dtype).itemsize

    vmem_limit = _vmem_limit_bytes()
    tile_m, tile_f = _pick_tiles(M, d_in_p, d_ff_p0, d_out_p,
                                 x_bytes, out_bytes, w_bytes, vmem_limit)
    d_ff_p = _round_up(d_ff, tile_f)
    M_p = _round_up(M, tile_m)

    # Pad weights/biases (one-time, tiny vs. activations).  Zero padding is exact:
    # padded x cols hit zero W1 rows; padded hidden cols get zero W1 cols / zero b1
    # -> relu(0)=0 -> contribute nothing through the zero padded W2 rows; padded
    # output rows/cols are sliced off below.
    w1_p = jnp.pad(w1.astype(compute_dtype),
                   ((0, d_in_p - d_model), (0, d_ff_p - d_ff)))
    w2_p = jnp.pad(w2.astype(compute_dtype),
                   ((0, d_ff_p - d_ff), (0, d_out_p - d_model)))
    b1_p = jnp.pad(b1.reshape(1, d_ff).astype(jnp.float32),
                   ((0, 0), (0, d_ff_p - d_ff)))
    b2_p = jnp.pad(b2.reshape(1, d_model).astype(jnp.float32),
                   ((0, 0), (0, d_out_p - d_model)))

    # x stays in its own dtype (bf16 cast happens in-kernel); pad only when needed so
    # aligned shapes skip the extra HBM pass entirely.
    x2d = x.reshape(M, d_model)
    if (M_p, d_in_p) != (M, d_model):
        x2d = jnp.pad(x2d, ((0, M_p - M), (0, d_in_p - d_model)))

    grid = (M_p // tile_m, d_ff_p // tile_f)

    flops = 2 * M_p * (d_in_p * d_ff_p + d_ff_p * d_out_p)
    bytes_accessed = (M_p * d_in_p * x_bytes
                      + grid[0] * (w1_p.size + w2_p.size) * w_bytes
                      + (b1_p.size + b2_p.size) * 4
                      + M_p * d_out_p * out_bytes)

    out2d = pl.pallas_call(
        _ffn_kernel,
        out_shape=jax.ShapeDtypeStruct((M_p, d_out_p), out_dtype),
        grid_spec=pltpu.PrefetchScalarGridSpec(
            num_scalar_prefetch=0,
            grid=grid,
            in_specs=[
                pl.BlockSpec((tile_m, d_in_p), lambda i, j: (i, 0)),    # x rows (const over j)
                pl.BlockSpec((d_in_p, tile_f), lambda i, j: (0, j)),    # W1 column chunk
                pl.BlockSpec((1, tile_f), lambda i, j: (0, j)),         # b1 chunk
                pl.BlockSpec((tile_f, d_out_p), lambda i, j: (j, 0)),   # W2 row chunk
                pl.BlockSpec((1, d_out_p), lambda i, j: (0, 0)),        # b2 (resident)
            ],
            out_specs=pl.BlockSpec((tile_m, d_out_p), lambda i, j: (i, 0)),
            scratch_shapes=[pltpu.VMEM((tile_m, d_out_p), jnp.float32)],
        ),
        compiler_params=pltpu.CompilerParams(
            dimension_semantics=("parallel", "arbitrary"),   # megacore-shardable rows
            vmem_limit_bytes=vmem_limit,
        ),
        cost_estimate=pl.CostEstimate(
            flops=flops, transcendentals=0, bytes_accessed=bytes_accessed),
    )(x2d, w1_p, b1_p, w2_p, b2_p)

    if (M_p, d_out_p) != (M, d_model):
        out2d = out2d[:M, :d_model]
    return out2d.reshape(B, S, d_model)


def _sample_bayesian_linear(key, d_in, d_out, dtype=jnp.float32):
    """Deterministic 'BayesianLinear' parameter sample: W = mu + softplus(rho) * eps.

    Returns weight in (in, out) layout (pre-transposed vs. PyTorch's (out, in)) and
    bias shaped (1, out) so the kernel can broadcast it over rows.
    """
    k_mu_w, k_rho_w, k_eps_w, k_mu_b, k_rho_b, k_eps_b = jax.random.split(key, 6)
    mu_w = jax.random.normal(k_mu_w, (d_out, d_in), dtype) * 0.1
    rho_w = jnp.full((d_out, d_in), -3.0, dtype)          # softplus(-3) ~= 0.0486
    eps_w = jax.random.normal(k_eps_w, (d_out, d_in), dtype)
    W = mu_w + jax.nn.softplus(rho_w) * eps_w             # (out, in)

    mu_b = jax.random.normal(k_mu_b, (d_out,), dtype) * 0.1
    rho_b = jnp.full((d_out,), -3.0, dtype)
    eps_b = jax.random.normal(k_eps_b, (d_out,), dtype)
    b = mu_b + jax.nn.softplus(rho_b) * eps_b

    return W.T, b.reshape(1, d_out)                       # (in, out), (1, out)


if __name__ == "__main__":
    key = jax.random.PRNGKey(0)
    k_x, k_w1, k_w2 = jax.random.split(key, 3)

    # Small shapes implied by the module: x is [batch, seq, d_model].
    batch, seq, d_model, d_ff = 2, 8, 32, 64
    x = jax.random.normal(k_x, (batch, seq, d_model), jnp.float32)

    w1, b1 = _sample_bayesian_linear(k_w1, d_model, d_ff)
    w2, b2 = _sample_bayesian_linear(k_w2, d_ff, d_model)

    out = positionwise_feed_forward(x, w1, b1, w2, b2)
    out = jax.block_until_ready(out)

    # Pure-JAX f32 reference check (kernel computes matmuls in bf16 -> loose tol).
    ref = jnp.maximum(x.reshape(-1, d_model) @ w1 + b1, 0.0) @ w2 + b2
    ref = ref.reshape(batch, seq, d_model)
    assert out.shape == (batch, seq, d_model)
    assert jnp.allclose(out, ref, atol=5e-2, rtol=5e-2), (
        float(jnp.max(jnp.abs(out - ref))))

    print("KERNEL_OK")
</pallas_src>

<mosaic_0001>
module attributes {stable_mosaic.version = 11 : i64} {
  func.func @_ffn_kernel(%arg0: i32, %arg1: i32, %arg2: memref<16x128xf32, #tpu.memory_space<vmem>>, %arg3: memref<128x128xbf16, #tpu.memory_space<vmem>>, %arg4: memref<1x128xf32, #tpu.memory_space<vmem>>, %arg5: memref<128x128xbf16, #tpu.memory_space<vmem>>, %arg6: memref<1x128xf32, #tpu.memory_space<vmem>>, %arg7: memref<16x128xf32, #tpu.memory_space<vmem>>, %arg8: memref<16x128xf32, #tpu.memory_space<vmem>>) attributes {dimension_semantics = [#tpu.dimension_semantics<parallel>, #tpu.dimension_semantics<arbitrary>], iteration_bounds = array<i64: 1, 1>, scalar_prefetch = 0 : i64, scratch_operands = 1 : i64, tpu.core_type = #tpu.core_type<tc>, window_params = [{transform_indices = @transform_0, window_bounds = array<i64: 16, 128>}, {transform_indices = @transform_1, window_bounds = array<i64: 128, 128>}, {transform_indices = @transform_2, window_bounds = array<i64: 1, 128>}, {transform_indices = @transform_3, window_bounds = array<i64: 128, 128>}, {pipeline_mode = #tpu.pipeline_mode<synchronous>, transform_indices = @transform_4, window_bounds = array<i64: 1, 128>}, {transform_indices = @transform_5, window_bounds = array<i64: 16, 128>}]} {
    %c0_i32 = arith.constant 0 : i32
    %0 = arith.cmpi eq, %arg1, %c0_i32 : i32
    %1 = arith.extui %0 : i1 to i32
    %c0_i32_0 = arith.constant 0 : i32
    %2 = arith.cmpi ne, %1, %c0_i32_0 : i32
    scf.if %2 {
      %cst_16 = arith.constant 0.000000e+00 : f32
      %21 = vector.broadcast %cst_16 : f32 to vector<16x128xf32>
      %c0_17 = arith.constant 0 : index
      %c0_18 = arith.constant 0 : index
      %22 = vector.load %arg8[%c0_17, %c0_18] : memref<16x128xf32, #tpu.memory_space<vmem>>, vector<16x128xf32>
      tpu.vector_store %arg8[%c0_17, %c0_18], %21 {strides = array<i32>} : memref<16x128xf32, #tpu.memory_space<vmem>>, vector<16x128xf32>,
    } else {
    }
    %c0 = arith.constant 0 : index
    %c0_1 = arith.constant 0 : index
    %3 = vector.load %arg2[%c0, %c0_1] : memref<16x128xf32, #tpu.memory_space<vmem>>, vector<16x128xf32>
    %4 = arith.truncf %3 : vector<16x128xf32> to vector<16x128xbf16>
    %c0_2 = arith.constant 0 : index
    %c0_3 = arith.constant 0 : index
    %5 = vector.load %arg3[%c0_2, %c0_3] : memref<128x128xbf16, #tpu.memory_space<vmem>>, vector<128x128xbf16>
    %cst = arith.constant dense<0.000000e+00> : vector<16x128xf32>
    %6 = tpu.matmul %4, %5, %cst {dimension_numbers = #tpu.dot_dimension_numbers<[1], [0], [0], [1], [0, 0, 1, 1], [], []>} : vector<16x128xbf16>, vector<128x128xbf16>, vector<16x128xf32> -> vector<16x128xf32>
    %c0_4 = arith.constant 0 : index
    %c0_5 = arith.constant 0 : index
    %7 = vector.load %arg4[%c0_4, %c0_5] : memref<1x128xf32, #tpu.memory_space<vmem>>, vector<1x128xf32>
    %8 = vector.broadcast %7 : vector<1x128xf32> to vector<16x128xf32>
    %9 = arith.addf %6, %8 : vector<16x128xf32>
    %cst_6 = arith.constant 0.000000e+00 : f32
    %10 = vector.broadcast %cst_6 : f32 to vector<16x128xf32>
    %11 = arith.maximumf %9, %10 : vector<16x128xf32>
    %c0_7 = arith.constant 0 : index
    %c0_8 = arith.constant 0 : index
    %12 = vector.load %arg8[%c0_7, %c0_8] : memref<16x128xf32, #tpu.memory_space<vmem>>, vector<16x128xf32>
    %13 = arith.truncf %11 : vector<16x128xf32> to vector<16x128xbf16>
    %c0_9 = arith.constant 0 : index
    %c0_10 = arith.constant 0 : index
    %14 = vector.load %arg5[%c0_9, %c0_10] : memref<128x128xbf16, #tpu.memory_space<vmem>>, vector<128x128xbf16>
    %cst_11 = arith.constant dense<0.000000e+00> : vector<16x128xf32>
    %15 = tpu.matmul %13, %14, %cst_11 {dimension_numbers = #tpu.dot_dimension_numbers<[1], [0], [0], [1], [0, 0, 1, 1], [], []>} : vector<16x128xbf16>, vector<128x128xbf16>, vector<16x128xf32> -> vector<16x128xf32>
    %16 = arith.addf %12, %15 : vector<16x128xf32>
    %c0_12 = arith.constant 0 : index
    %c0_13 = arith.constant 0 : index
    %17 = vector.load %arg8[%c0_12, %c0_13] : memref<16x128xf32, #tpu.memory_space<vmem>>, vector<16x128xf32>
    tpu.vector_store %arg8[%c0_12, %c0_13], %16 {strides = array<i32>} : memref<16x128xf32, #tpu.memory_space<vmem>>, vector<16x128xf32>,
    %c0_i32_14 = arith.constant 0 : i32
    %18 = arith.cmpi eq, %arg1, %c0_i32_14 : i32
    %19 = arith.extui %18 : i1 to i32
    %c0_i32_15 = arith.constant 0 : i32
    %20 = arith.cmpi ne, %19, %c0_i32_15 : i32
    scf.if %20 {
      %c0_16 = arith.constant 0 : index
      %c0_17 = arith.constant 0 : index
      %21 = vector.load %arg8[%c0_16, %c0_17] : memref<16x128xf32, #tpu.memory_space<vmem>>, vector<16x128xf32>
      %c0_18 = arith.constant 0 : index
      %c0_19 = arith.constant 0 : index
      %22 = vector.load %arg6[%c0_18, %c0_19] : memref<1x128xf32, #tpu.memory_space<vmem>>, vector<1x128xf32>
      %23 = vector.broadcast %22 : vector<1x128xf32> to vector<16x128xf32>
      %24 = arith.addf %21, %23 : vector<16x128xf32>
      %c0_20 = arith.constant 0 : index
      %c0_21 = arith.constant 0 : index
      %25 = vector.load %arg7[%c0_20, %c0_21] : memref<16x128xf32, #tpu.memory_space<vmem>>, vector<16x128xf32>
      tpu.vector_store %arg7[%c0_20, %c0_21], %24 {strides = array<i32>} : memref<16x128xf32, #tpu.memory_space<vmem>>, vector<16x128xf32>,
    } else {
    }
    return
  }
  func.func @transform_0(%arg0: i32, %arg1: i32) -> (i32, i32) {
    %c0_i32 = arith.constant 0 : i32
    %c0_i32_0 = arith.constant 0 : i32
    return %arg0, %c0_i32 : i32, i32
  }
  func.func @transform_1(%arg0: i32, %arg1: i32) -> (i32, i32) {
    %c0_i32 = arith.constant 0 : i32
    %c0_i32_0 = arith.constant 0 : i32
    return %c0_i32, %arg1 : i32, i32
  }
  func.func @transform_2(%arg0: i32, %arg1: i32) -> (i32, i32) {
    %c0_i32 = arith.constant 0 : i32
    %c0_i32_0 = arith.constant 0 : i32
    return %c0_i32, %arg1 : i32, i32
  }
  func.func @transform_3(%arg0: i32, %arg1: i32) -> (i32, i32) {
    %c0_i32 = arith.constant 0 : i32
    %c0_i32_0 = arith.constant 0 : i32
    return %arg1, %c0_i32 : i32, i32
  }
  func.func @transform_4(%arg0: i32, %arg1: i32) -> (i32, i32) {
    %c0_i32 = arith.constant 0 : i32
    %c0_i32_0 = arith.constant 0 : i32
    %c0_i32_1 = arith.constant 0 : i32
    return %c0_i32, %c0_i32_0 : i32, i32
  }
  func.func @transform_5(%arg0: i32, %arg1: i32) -> (i32, i32) {
    %c0_i32 = arith.constant 0 : i32
    %c0_i32_0 = arith.constant 0 : i32
    return %arg0, %c0_i32 : i32, i32
  }
}

</mosaic_0001>

<llo_original>
// kernel: tpu_custom_call.1
$region0: #{tpu_custom_call.1}
  #allocation0 [shape = 'u32[]', space=smem, size = 0x4, offset = 0x4, fixed_abs, tag = 'smem constant byte address 0x4 - core index']
  #allocation1 [shape = 'u32[144,128]{1,0:T(1,128)}', space=vmem, size = 0x12000, scoped, tag = 'internal scratch']
  #allocation2 [shape = 'f32[16,128]{1,0:T(8,128)}', space=vmem, size = 0x2000, scoped, tag = 'scratch operand']
  %s0 = inlined_call_operand.hbm [shape: f32[16,128], index: 0, kind: input, shape index: {}]
  %s1 = inlined_call_operand.hbm [shape: bf16[128,128], index: 1, kind: input, shape index: {}]
  %s2 = inlined_call_operand.vmem [shape: f32[1,128], index: 2, kind: input, shape index: {}]
  %s3 = inlined_call_operand.hbm [shape: bf16[128,128], index: 3, kind: input, shape index: {}]
  %s4 = inlined_call_operand.vmem [shape: f32[1,128], index: 4, kind: input, shape index: {}]
  %s5 = inlined_call_operand.hbm [shape: f32[16,128], index: 5, kind: output, shape index: {}]
  %s6 = sld [smem:[#allocation0]]
  $region50: #{tpu_custom_call.1} parent=0
    _
  %s8 = ssub.s32 1, %s6
  %s9 = scalar_select 0, %s8, %s6
  $region1: #{tpu_custom_call.1} parent=0
    #allocation3 [shape = 'u8[8192]{0}', space=vmem, size = 0x2000, scoped, tag = 'input window, operand 0, single buffered']
    #allocation4 [shape = 's32[1]{0}', space=sflag, size = 0x4, scoped, tag = 'scoped memory for tpu_custom_call.1']
    #allocation5 [shape = 's32[1]{0}', space=sflag, size = 0x4, scoped, tag = 'scoped memory for tpu_custom_call.1']
    #allocation6 [shape = 'u8[32768]{0}', space=vmem, size = 0x8000, scoped, tag = 'input window, operand 1, single buffered']
    #allocation7 [shape = 's32[1]{0}', space=sflag, size = 0x4, scoped, tag = 'scoped memory for tpu_custom_call.1']
    #allocation8 [shape = 'u8[32768]{0}', space=vmem, size = 0x8000, scoped, tag = 'input window, operand 3, single buffered']
    #allocation9 [shape = 'u8[8192]{0}', space=vmem, size = 0x2000, scoped, tag = 'output window, operand 0, single buffered']
    %10 = vsyncpa [#allocation4], 0
    %11 = vsyncpa [#allocation7], 0
    %12 = vsyncpa [#allocation5], 0
    // Predicated region
    $region2: #{tpu_custom_call.1} parent=1 // pred_check
      _
    $region3: #{tpu_custom_call.1} parent=1 // pred_check_branch
      %14 = sbr.rel (0) target = $region5
    $region4: #{tpu_custom_call.1} parent=1 // pred_region
      %s16 = ssub.s32 256, 256
      %17 = vsyncadd [#allocation4], %s16
      %s18 = sshll.u32 [#allocation3], 4
      %s19 = int_to_ptr.vmem [resolvable:$true] %s18
      %24 = dma.hbm_to_vmem [thread:$0]  %s0, 256, %s19, [#allocation4], 128, 128, 8
    $region5: #{tpu_custom_call.1} parent=1 // pred_fallthru
      _
    // Predicated region
    $region6: #{tpu_custom_call.1} parent=1 // pred_check
      _
    $region7: #{tpu_custom_call.1} parent=1 // pred_check_branch
      %26 = sbr.rel (0) target = $region9
    $region8: #{tpu_custom_call.1} parent=1 // pred_region
      %s28 = ssub.s32 1024, 1024
      %29 = vsyncadd [#allocation7], %s28
      %s30 = sshll.u32 [#allocation6], 4
      %s31 = int_to_ptr.vmem [resolvable:$true] %s30
      %36 = dma.hbm_to_vmem [thread:$0]  %s1, 1024, %s31, [#allocation7], 64, 64, 4
    $region9: #{tpu_custom_call.1} parent=1 // pred_fallthru
      _
    // Predicated region
    $region10: #{tpu_custom_call.1} parent=1 // pred_check
      _
    $region11: #{tpu_custom_call.1} parent=1 // pred_check_branch
      %38 = sbr.rel (0) target = $region13
    $region12: #{tpu_custom_call.1} parent=1 // pred_region
      _
    $region13: #{tpu_custom_call.1} parent=1 // pred_fallthru
      _
    // Predicated region
    $region14: #{tpu_custom_call.1} parent=1 // pred_check
      _
    $region15: #{tpu_custom_call.1} parent=1 // pred_check_branch
      %40 = sbr.rel (0) target = $region17
    $region16: #{tpu_custom_call.1} parent=1 // pred_region
      %s42 = ssub.s32 1024, 1024
      %43 = vsyncadd [#allocation7], %s42
      %s44 = sshll.u32 [#allocation8], 4
      %s45 = int_to_ptr.vmem [resolvable:$true] %s44
      %50 = dma.hbm_to_vmem [thread:$0]  %s3, 1024, %s45, [#allocation7], 64, 64, 4
    $region17: #{tpu_custom_call.1} parent=1 // pred_fallthru
      _
    // Predicated region
    $region18: #{tpu_custom_call.1} parent=1 // pred_check
      _
    $region19: #{tpu_custom_call.1} parent=1 // pred_check_branch
      %52 = sbr.rel (0) target = $region21
    $region20: #{tpu_custom_call.1} parent=1 // pred_region
      _
    $region21: #{tpu_custom_call.1} parent=1 // pred_fallthru
      _
    // Predicated region
    $region22: #{tpu_custom_call.1} parent=1 // pred_check
      _
    $region23: #{tpu_custom_call.1} parent=1 // pred_check_branch
      %54 = sbr.rel (0) target = $region25
    $region24: #{tpu_custom_call.1} parent=1 // pred_region
      %55 = dma.done [#allocation4], 256
    $region25: #{tpu_custom_call.1} parent=1 // pred_fallthru
      _
    // Predicated region
    $region26: #{tpu_custom_call.1} parent=1 // pred_check
      _
    $region27: #{tpu_custom_call.1} parent=1 // pred_check_branch
      %57 = sbr.rel (0) target = $region29
    $region28: #{tpu_custom_call.1} parent=1 // pred_region
      %58 = dma.done [#allocation7], 1024
    $region29: #{tpu_custom_call.1} parent=1 // pred_fallthru
      _
    // Predicated region
    $region30: #{tpu_custom_call.1} parent=1 // pred_check
      _
    $region31: #{tpu_custom_call.1} parent=1 // pred_check_branch
      %60 = sbr.rel (0) target = $region33
    $region32: #{tpu_custom_call.1} parent=1 // pred_region
      %61 = dma.done [#allocation7], 1024
    $region33: #{tpu_custom_call.1} parent=1 // pred_fallthru
      _
    %p63 = scmp.eq.s32.totalorder 0, 0
    // Predicated region
    $region34: #{tpu_custom_call.1} parent=1 // pred_check
      %p64 = pneg %p63
    $region35: #{tpu_custom_call.1} parent=1 // pred_check_branch
      %66 = sbr.rel (%p64) target = $region37
    $region36: #{tpu_custom_call.1} parent=1 // pred_region
      %67 = vst [vmem:[#allocation2] sm:$0xff] 0.0
      %68 = vst [vmem:[#allocation2 + $0x8] sm:$0xff] 0.0
    $region37: #{tpu_custom_call.1} parent=1 // pred_fallthru
      _
    %v69 = vld [vmem:[#allocation3] sm:$0xff]
    %v70 = vld [vmem:[#allocation3 + $0x8] sm:$0xff]
    %v71 = vpack.c.bf16 %v70, %v69
    %v72 = vld [vmem:[#allocation6] sm:$0xf]
    %v73 = vld [vmem:[#allocation6 + $0x4] sm:$0xf]
    %v74 = vld [vmem:[#allocation6 + $0x8] sm:$0xf]
    %v75 = vld [vmem:[#allocation6 + $0xc] sm:$0xf]
    %v76 = vld [vmem:[#allocation6 + $0x10] sm:$0xf]
    %v77 = vld [vmem:[#allocation6 + $0x14] sm:$0xf]
    %v78 = vld [vmem:[#allocation6 + $0x18] sm:$0xf]
    %v79 = vld [vmem:[#allocation6 + $0x1c] sm:$0xf]
    %v80 = vld [vmem:[#allocation6 + $0x20] sm:$0xf]
    %v81 = vld [vmem:[#allocation6 + $0x24] sm:$0xf]
    %v82 = vld [vmem:[#allocation6 + $0x28] sm:$0xf]
    %v83 = vld [vmem:[#allocation6 + $0x2c] sm:$0xf]
    %v84 = vld [vmem:[#allocation6 + $0x30] sm:$0xf]
    %v85 = vld [vmem:[#allocation6 + $0x34] sm:$0xf]
    %v86 = vld [vmem:[#allocation6 + $0x38] sm:$0xf]
    %v87 = vld [vmem:[#allocation6 + $0x3c] sm:$0xf]
    %v88 = vld [vmem:[%s2] sm:$0x1]
    %v90 = vlaneseq
    %v91 = vshrl.u32 %v90, 7
    %v92 = vsub.s32 0, %v91
    %v93 = vrot.slane %v88, %v92
    %v111 = vunpack.c.l.b16 %v72
    %v112 = vunpack.c.l.b16 %v73
    %v113 = vunpack.c.l.b16 %v74
    %v114 = vunpack.c.l.b16 %v75
    %v115 = vunpack.c.l.b16 %v76
    %v116 = vunpack.c.l.b16 %v77
    %v117 = vunpack.c.l.b16 %v78
    %v118 = vunpack.c.l.b16 %v79
    %v119 = vunpack.c.l.b16 %v80
    %v120 = vunpack.c.l.b16 %v81
    %v121 = vunpack.c.l.b16 %v82
    %v122 = vunpack.c.l.b16 %v83
    %v123 = vunpack.c.l.b16 %v84
    %v124 = vunpack.c.l.b16 %v85
    %v125 = vunpack.c.l.b16 %v86
    %v126 = vunpack.c.l.b16 %v87
    %v127 = vpack.c.b16 %v112, %v111
    %v128 = vpack.c.b16 %v114, %v113
    %v129 = vpack.c.b16 %v116, %v115
    %v130 = vpack.c.b16 %v118, %v117
    %v131 = vpack.c.b16 %v120, %v119
    %v132 = vpack.c.b16 %v122, %v121
    %v133 = vpack.c.b16 %v124, %v123
    %v134 = vpack.c.b16 %v126, %v125
    %143 = vmatprep.subr.bf16.mxu0 0
    %144 = vmatpush1.bf16.msra.mxu0 %v127
    %145 = vmatprep.subr.bf16.mxu0 0
    %146 = vmatpush1.bf16.msra.mxu0 %v128
    %147 = vmatprep.subr.bf16.mxu0 0
    %148 = vmatpush1.bf16.msra.mxu0 %v129
    %149 = vmatprep.subr.bf16.mxu0 0
    %150 = vmatpush1.bf16.msra.mxu0 %v130
    %151 = vmatprep.subr.bf16.mxu0 0
    %152 = vmatpush1.bf16.msra.mxu0 %v131
    %153 = vmatprep.subr.bf16.mxu0 0
    %154 = vmatpush1.bf16.msra.mxu0 %v132
    %155 = vmatprep.subr.bf16.mxu0 0
    %156 = vmatpush1.bf16.msra.mxu0 %v133
    %157 = vmatprep.subr.bf16.mxu0 0
    %158 = vmatpush1.bf16.msra.mxu0 %v134
    %159 = vmatprep.subr.bf16.mxu0 0
    %160 = vmatpush1.bf16.msra.mxu0 0
    %161 = vmatprep.subr.bf16.mxu0 0
    %162 = vmatpush1.bf16.msra.mxu0 0
    %163 = vmatprep.subr.bf16.mxu0 0
    %164 = vmatpush1.bf16.msra.mxu0 0
    %165 = vmatprep.subr.bf16.mxu0 0
    %166 = vmatpush1.bf16.msra.mxu0 0
    %167 = vmatprep.subr.bf16.mxu0 0
    %168 = vmatpush1.bf16.msra.mxu0 0
    %169 = vmatprep.subr.bf16.mxu0 0
    %170 = vmatpush1.bf16.msra.mxu0 0
    %171 = vmatprep.subr.bf16.mxu0 0
    %172 = vmatpush1.bf16.msra.mxu0 0
    %173 = vmatprep.subr.bf16.mxu0 0
    %174 = vmatpush1.bf16.msra.mxu0 0
    %175 = vmatprep.mubr.bf16.mxu0 0
    %176 = vmatmul.mubr.bf16.gmra.mrb[0].mxu0 %v71
    %v177 = vpop.f32.mrb[0].mxu0
    %v178 = vadd.f32 %v93, %v177
    %v179 = vpop.f32.mrb[0].mxu0
    %v180 = vpop.f32.mrb[0].mxu0
    %v181 = vadd.f32 %v93, %v180
    %v182 = vpop.f32.mrb[0].mxu0
    %183 = vdwg.mxu0
    %v184 = vmax.f32 %v178, 0.0
    %v185 = vmax.f32 %v181, 0.0
    %v186 = vld [vmem:[#allocation2] sm:$0xff]
    %v187 = vld [vmem:[#allocation2 + $0x8] sm:$0xff]
    %v188 = vpack.c.bf16 %v185, %v184
    %v189 = vld [vmem:[#allocation8] sm:$0xf]
    %v190 = vld [vmem:[#allocation8 + $0x4] sm:$0xf]
    %v191 = vld [vmem:[#allocation8 + $0x8] sm:$0xf]
    %v192 = vld [vmem:[#allocation8 + $0xc] sm:$0xf]
    %v193 = vld [vmem:[#allocation8 + $0x10] sm:$0xf]
    %v194 = vld [vmem:[#allocation8 + $0x14] sm:$0xf]
    %v195 = vld [vmem:[#allocation8 + $0x18] sm:$0xf]
    %v196 = vld [vmem:[#allocation8 + $0x1c] sm:$0xf]
    %v197 = vld [vmem:[#allocation8 + $0x20] sm:$0xf]
    %v198 = vld [vmem:[#allocation8 + $0x24] sm:$0xf]
    %v199 = vld [vmem:[#allocation8 + $0x28] sm:$0xf]
    %v200 = vld [vmem:[#allocation8 + $0x2c] sm:$0xf]
    %v201 = vld [vmem:[#allocation8 + $0x30] sm:$0xf]
    %v202 = vld [vmem:[#allocation8 + $0x34] sm:$0xf]
    %v203 = vld [vmem:[#allocation8 + $0x38] sm:$0xf]
    %v204 = vld [vmem:[#allocation8 + $0x3c] sm:$0xf]
    %v221 = vunpack.c.l.b16 %v189
    %v222 = vunpack.c.l.b16 %v190
    %v223 = vunpack.c.l.b16 %v191
    %v224 = vunpack.c.l.b16 %v192
    %v225 = vunpack.c.l.b16 %v193
    %v226 = vunpack.c.l.b16 %v194
    %v227 = vunpack.c.l.b16 %v195
    %v228 = vunpack.c.l.b16 %v196
    %v229 = vunpack.c.l.b16 %v197
    %v230 = vunpack.c.l.b16 %v198
    %v231 = vunpack.c.l.b16 %v199
    %v232 = vunpack.c.l.b16 %v200
    %v233 = vunpack.c.l.b16 %v201
    %v234 = vunpack.c.l.b16 %v202
    %v235 = vunpack.c.l.b16 %v203
    %v236 = vunpack.c.l.b16 %v204
    %v237 = vpack.c.b16 %v222, %v221
    %v238 = vpack.c.b16 %v224, %v223
    %v239 = vpack.c.b16 %v226, %v225
    %v240 = vpack.c.b16 %v228, %v227
    %v241 = vpack.c.b16 %v230, %v229
    %v242 = vpack.c.b16 %v232, %v231
    %v243 = vpack.c.b16 %v234, %v233
    %v244 = vpack.c.b16 %v236, %v235
    %253 = vmatprep.subr.bf16.mxu0 0
    %254 = vmatpush1.bf16.msra.mxu0 %v237
    %255 = vmatprep.subr.bf16.mxu0 0
    %256 = vmatpush1.bf16.msra.mxu0 %v238
    %257 = vmatprep.subr.bf16.mxu0 0
    %258 = vmatpush1.bf16.msra.mxu0 %v239
    %259 = vmatprep.subr.bf16.mxu0 0
    %260 = vmatpush1.bf16.msra.mxu0 %v240
    %261 = vmatprep.subr.bf16.mxu0 0
    %262 = vmatpush1.bf16.msra.mxu0 %v241
    %263 = vmatprep.subr.bf16.mxu0 0
    %264 = vmatpush1.bf16.msra.mxu0 %v242
    %265 = vmatprep.subr.bf16.mxu0 0
    %266 = vmatpush1.bf16.msra.mxu0 %v243
    %267 = vmatprep.subr.bf16.mxu0 0
    %268 = vmatpush1.bf16.msra.mxu0 %v244
    %269 = vmatprep.subr.bf16.mxu0 0
    %270 = vmatpush1.bf16.msra.mxu0 0
    %271 = vmatprep.subr.bf16.mxu0 0
    %272 = vmatpush1.bf16.msra.mxu0 0
    %273 = vmatprep.subr.bf16.mxu0 0
    %274 = vmatpush1.bf16.msra.mxu0 0
    %275 = vmatprep.subr.bf16.mxu0 0
    %276 = vmatpush1.bf16.msra.mxu0 0
    %277 = vmatprep.subr.bf16.mxu0 0
    %278 = vmatpush1.bf16.msra.mxu0 0
    %279 = vmatprep.subr.bf16.mxu0 0
    %280 = vmatpush1.bf16.msra.mxu0 0
    %281 = vmatprep.subr.bf16.mxu0 0
    %282 = vmatpush1.bf16.msra.mxu0 0
    %283 = vmatprep.subr.bf16.mxu0 0
    %284 = vmatpush1.bf16.msra.mxu0 0
    %285 = vmatprep.mubr.bf16.mxu0 0
    %286 = vmatmul.mubr.bf16.gmra.mrb[0].mxu0 %v188
    %v287 = vpop.f32.mrb[0].mxu0
    %v288 = vadd.f32 0.0, %v287
    %v289 = vpop.f32.mrb[0].mxu0
    %v290 = vpop.f32.mrb[0].mxu0
    %v291 = vadd.f32 0.0, %v290
    %v292 = vpop.f32.mrb[0].mxu0
    %293 = vdwg.mxu0
    %v294 = vadd.f32 %v186, %v288
    %v295 = vadd.f32 %v187, %v291
    %296 = vst [vmem:[#allocation2] sm:$0xff] %v294
    %297 = vst [vmem:[#allocation2 + $0x8] sm:$0xff] %v295
    // Predicated region
    $region38: #{tpu_custom_call.1} parent=1 // pred_check
      %p298 = pneg %p63
    $region39: #{tpu_custom_call.1} parent=1 // pred_check_branch
      %300 = sbr.rel (%p298) target = $region41
    $region40: #{tpu_custom_call.1} parent=1 // pred_region
      %v301 = vld [vmem:[#allocation2] sm:$0xff]
      %v302 = vld [vmem:[#allocation2 + $0x8] sm:$0xff]
      %v303 = vld [vmem:[%s4] sm:$0x1]
      %v305 = vlaneseq
      %v306 = vshrl.u32 %v305, 7
      %v307 = vsub.s32 0, %v306
      %v308 = vrot.slane %v303, %v307
      %v310 = vadd.f32 %v301, %v308
      %v311 = vadd.f32 %v302, %v308
      %312 = vst [vmem:[#allocation9] sm:$0xff] %v310
      %313 = vst [vmem:[#allocation9 + $0x8] sm:$0xff] %v311
    $region41: #{tpu_custom_call.1} parent=1 // pred_fallthru
      _
    // Predicated region
    $region42: #{tpu_custom_call.1} parent=1 // pred_check
      _
    $region43: #{tpu_custom_call.1} parent=1 // pred_check_branch
      %315 = sbr.rel (0) target = $region45
    $region44: #{tpu_custom_call.1} parent=1 // pred_region
      %s317 = ssub.s32 256, 256
      %318 = vsyncadd [#allocation5], %s317
      %s319 = sshll.u32 [#allocation9], 4
      %s320 = int_to_ptr.vmem [resolvable:$true] %s319
      %325 = dma.vmem_to_hbm [thread:$0]  %s320, 256, %s5, [#allocation5], 128, 128, 8
    $region45: #{tpu_custom_call.1} parent=1 // pred_fallthru
      _
    // Predicated region
    $region46: #{tpu_custom_call.1} parent=1 // pred_check
      _
    $region47: #{tpu_custom_call.1} parent=1 // pred_check_branch
      %327 = sbr.rel (0) target = $region49
    $region48: #{tpu_custom_call.1} parent=1 // pred_region
      %328 = dma.done [#allocation5], 256
    $region49: #{tpu_custom_call.1} parent=1 // pred_fallthru
      _
    %329 = vsyncpa [#allocation4], 1
    %330 = vsyncpa [#allocation7], 1
    %331 = vsyncpa [#allocation5], 1

</llo_original>
